<compile_context>
chip_gen: v7x
topology: tpu7x:2x2x1
jax: 0.10.0
libtpu: 0.0.40
codegen_flags: <defaults>
</compile_context>

<pallas_src>
import jax
import jax.numpy as jnp
from jax.experimental import pallas as pl
from jax.experimental.pallas import tpu as pltpu


# ----------------------------------------------------------------------------
# Tiling helpers
# ----------------------------------------------------------------------------

# Per-buffer tile target.  2 in-flight input buffers + 2 output buffers
# => ~4x this in VMEM.  8 MiB keeps per-step overhead (~0.35 us) negligible
# relative to the tile's HBM transfer time on all of v5e/v6e/v7x while staying
# well under v7x's 64 MiB physical VMEM.
_TILE_BYTES_TARGET = 8 * 1024 * 1024
_VMEM_LIMIT_BYTES = 48 * 1024 * 1024      # explicit; safe on v5e/v6e/v7x


def _round_up(x: int, m: int) -> int:
    return ((x + m - 1) // m) * m


def _sublane_multiple(dtype_bytes: int) -> int:
    # f32 -> 8, bf16/f16 -> 16, int8/fp8 -> 32 (sublane packing granularity).
    return max(8, 32 // max(1, dtype_bytes))


def _choose_row_tile(rows: int, features: int, dtype_bytes: int) -> int:
    """Rows-per-tile for the (rows, F) layout (F on lanes). Byte-budgeted."""
    sub = _sublane_multiple(dtype_bytes)
    per_row = max(1, features * dtype_bytes)
    t = _TILE_BYTES_TARGET // per_row
    t = (t // sub) * sub
    t = max(sub, t)
    # Never larger than the (sublane-rounded) array extent.
    return min(t, _round_up(rows, sub))


# ----------------------------------------------------------------------------
# Kernel: LayerNorm along the last (lane) axis, tile = (row_tile, F)
# ----------------------------------------------------------------------------

def _make_layernorm_kernel(eps: float, features: int):
    # TODO(synk): features == 1 gives unbiased std with N-1 == 0; PyTorch also
    # returns NaN there, so no special handling (guard only avoids a Python
    # ZeroDivisionError at trace time).
    inv_nm1 = (1.0 / (features - 1)) if features > 1 else float("nan")
    inv_n = 1.0 / features

    def kernel(x_ref, alpha_ref, bias_ref, o_ref):
        x = x_ref[...].astype(jnp.float32)                       # (T, F)
        # Two-pass statistics: numerically matches PyTorch's (x - mean) based
        # unbiased std even when |mean| >> std.  Both reductions hit the XLU,
        # which has plenty of slack while the kernel is HBM-bound.
        mean = jnp.sum(x, axis=-1, keepdims=True) * inv_n        # (T, 1)
        diff = x - mean
        var = jnp.sum(diff * diff, axis=-1, keepdims=True) * inv_nm1
        std = jnp.sqrt(var)
        # Per-row reciprocal (small column), tile-wide op is a multiply.
        inv = pl.reciprocal(std + eps, approx=False)             # (T, 1)
        alpha = alpha_ref[...].astype(jnp.float32)               # (1, F)
        bias = bias_ref[...].astype(jnp.float32)                 # (1, F)
        y = alpha * (diff * inv) + bias
        o_ref[...] = y.astype(o_ref.dtype)

    return kernel


# ----------------------------------------------------------------------------
# Wrapper (Encoder forward)
# ----------------------------------------------------------------------------

def encoder_forward(x, alpha, bias, *, eps=1e-6):
    """Encoder forward: (empty layer stack) + LayerNormalization kernel.

    x:      (B, S, F)
    alpha:  (F,)
    bias:   (F,)
    """
    B, S, F = x.shape

    # TODO(synk): Encoder.layers is a generic nn.ModuleList with no concrete
    # definition in the spec; instantiated empty, so x passes straight to the
    # final LayerNorm.

    rows = B * S
    x2d = x.reshape(rows, F)

    dtype_bytes = jnp.dtype(x.dtype).itemsize
    row_tile = _choose_row_tile(rows, F, dtype_bytes)
    grid = (pl.cdiv(rows, row_tile),)

    compiler_params = pltpu.CompilerParams(
        # "parallel" lets the runtime shard the row-tile axis across the two
        # TensorCores on v7x (megacore); no-op on v5e/v6e.
        dimension_semantics=("parallel",),
        vmem_limit_bytes=_VMEM_LIMIT_BYTES,
    )

    out2d = pl.pallas_call(
        _make_layernorm_kernel(eps, F),
        out_shape=jax.ShapeDtypeStruct((rows, F), x.dtype),
        grid_spec=pltpu.PrefetchScalarGridSpec(
            num_scalar_prefetch=0,
            grid=grid,
            in_specs=[
                pl.BlockSpec((row_tile, F), lambda i: (i, 0)),   # x rows
                pl.BlockSpec((1, F), lambda i: (0, 0)),          # alpha
                pl.BlockSpec((1, F), lambda i: (0, 0)),          # bias
            ],
            out_specs=pl.BlockSpec((row_tile, F), lambda i: (i, 0)),
        ),
        compiler_params=compiler_params,
    )(x2d, alpha.reshape(1, F), bias.reshape(1, F))

    return out2d.reshape(B, S, F)


def encoder_forward_ref(x, alpha, bias, eps=1e-6):
    """Plain-JAX reference matching PyTorch semantics (unbiased std)."""
    mean = jnp.mean(x, axis=-1, keepdims=True)
    diff = x - mean
    var = jnp.sum(diff * diff, axis=-1, keepdims=True) / (x.shape[-1] - 1)
    std = jnp.sqrt(var)
    return alpha * diff / (std + eps) + bias


if __name__ == "__main__":
    key = jax.random.PRNGKey(0)

    # --- primary test: small F (F < 128, natural layout, masked lane stores) ---
    B, S, F = 2, 8, 32
    x = jax.random.normal(key, (B, S, F), dtype=jnp.float32)
    # Deterministic parameter init, matching LayerNormalization.__init__:
    alpha = jnp.ones((F,), dtype=jnp.float32)
    bias = jnp.zeros((F,), dtype=jnp.float32)

    out = jax.block_until_ready(encoder_forward(x, alpha, bias))
    ref = encoder_forward_ref(x, alpha, bias)
    assert out.shape == (B, S, F)
    assert jnp.allclose(out, ref, atol=2e-5, rtol=2e-5), "mismatch (small-F path)"

    # --- secondary test: F >= 128 ---
    F2 = 256
    x2 = jax.random.normal(jax.random.PRNGKey(1), (B, S, F2), dtype=jnp.float32)
    alpha2 = jnp.ones((F2,), dtype=jnp.float32)
    bias2 = jnp.zeros((F2,), dtype=jnp.float32)

    out2 = jax.block_until_ready(encoder_forward(x2, alpha2, bias2))
    ref2 = encoder_forward_ref(x2, alpha2, bias2)
    assert out2.shape == (B, S, F2)
    assert jnp.allclose(out2, ref2, atol=2e-5, rtol=2e-5), "mismatch (F>=128 path)"

    # --- third test: rows not a multiple of the sublane/tile size
    # (exercises the pad-free cdiv grid / clipped partial last block) ---
    B3, S3, F3 = 2, 7, 96          # rows = 14, not a multiple of 8
    x3 = jax.random.normal(jax.random.PRNGKey(2), (B3, S3, F3), dtype=jnp.float32)
    alpha3 = jnp.ones((F3,), dtype=jnp.float32)
    bias3 = jnp.zeros((F3,), dtype=jnp.float32)

    out3 = jax.block_until_ready(encoder_forward(x3, alpha3, bias3))
    ref3 = encoder_forward_ref(x3, alpha3, bias3)
    assert out3.shape == (B3, S3, F3)
    assert jnp.allclose(out3, ref3, atol=2e-5, rtol=2e-5), "mismatch (partial-tile path)"

    print("KERNEL_OK")
</pallas_src>

<mosaic_0001>
module attributes {stable_mosaic.version = 11 : i64} {
  func.func @kernel(%arg0: i32, %arg1: memref<16x32xf32, #tpu.memory_space<vmem>>, %arg2: memref<1x32xf32, #tpu.memory_space<vmem>>, %arg3: memref<1x32xf32, #tpu.memory_space<vmem>>, %arg4: memref<16x32xf32, #tpu.memory_space<vmem>>) attributes {dimension_semantics = [#tpu.dimension_semantics<parallel>], iteration_bounds = array<i64: 1>, scalar_prefetch = 0 : i64, scratch_operands = 0 : i64, tpu.core_type = #tpu.core_type<tc>, window_params = [{transform_indices = @transform_0, window_bounds = array<i64: 16, 32>}, {pipeline_mode = #tpu.pipeline_mode<synchronous>, transform_indices = @transform_1, window_bounds = array<i64: 1, 32>}, {pipeline_mode = #tpu.pipeline_mode<synchronous>, transform_indices = @transform_2, window_bounds = array<i64: 1, 32>}, {transform_indices = @transform_3, window_bounds = array<i64: 16, 32>}]} {
    %c0 = arith.constant 0 : index
    %c0_0 = arith.constant 0 : index
    %0 = vector.load %arg1[%c0, %c0_0] : memref<16x32xf32, #tpu.memory_space<vmem>>, vector<16x32xf32>
    %cst = arith.constant dense<0.000000e+00> : vector<16xf32>
    %1 = vector.multi_reduction <add>, %0, %cst [1] : vector<16x32xf32> to vector<16xf32>
    %2 = vector.shape_cast %1 : vector<16xf32> to vector<16x1xf32>
    %cst_1 = arith.constant 3.125000e-02 : f32
    %3 = vector.broadcast %cst_1 : f32 to vector<16x1xf32>
    %4 = arith.mulf %2, %3 : vector<16x1xf32>
    %5 = vector.broadcast %4 : vector<16x1xf32> to vector<16x32xf32>
    %6 = arith.subf %0, %5 : vector<16x32xf32>
    %7 = arith.mulf %6, %6 : vector<16x32xf32>
    %cst_2 = arith.constant dense<0.000000e+00> : vector<16xf32>
    %8 = vector.multi_reduction <add>, %7, %cst_2 [1] : vector<16x32xf32> to vector<16xf32>
    %9 = vector.shape_cast %8 : vector<16xf32> to vector<16x1xf32>
    %cst_3 = arith.constant 0.0322580636 : f32
    %10 = vector.broadcast %cst_3 : f32 to vector<16x1xf32>
    %11 = arith.mulf %9, %10 : vector<16x1xf32>
    %12 = math.sqrt %11 : vector<16x1xf32>
    %cst_4 = arith.constant 9.99999997E-7 : f32
    %13 = vector.broadcast %cst_4 : f32 to vector<16x1xf32>
    %14 = arith.addf %12, %13 : vector<16x1xf32>
    %15 = tpu.reciprocal %14 : vector<16x1xf32> -> vector<16x1xf32>
    %c0_5 = arith.constant 0 : index
    %c0_6 = arith.constant 0 : index
    %16 = vector.load %arg2[%c0_5, %c0_6] : memref<1x32xf32, #tpu.memory_space<vmem>>, vector<1x32xf32>
    %c0_7 = arith.constant 0 : index
    %c0_8 = arith.constant 0 : index
    %17 = vector.load %arg3[%c0_7, %c0_8] : memref<1x32xf32, #tpu.memory_space<vmem>>, vector<1x32xf32>
    %18 = vector.broadcast %15 : vector<16x1xf32> to vector<16x32xf32>
    %19 = arith.mulf %6, %18 : vector<16x32xf32>
    %20 = vector.broadcast %16 : vector<1x32xf32> to vector<16x32xf32>
    %21 = arith.mulf %20, %19 : vector<16x32xf32>
    %22 = vector.broadcast %17 : vector<1x32xf32> to vector<16x32xf32>
    %23 = arith.addf %21, %22 : vector<16x32xf32>
    %c0_9 = arith.constant 0 : index
    %c0_10 = arith.constant 0 : index
    %24 = vector.load %arg4[%c0_9, %c0_10] : memref<16x32xf32, #tpu.memory_space<vmem>>, vector<16x32xf32>
    tpu.vector_store %arg4[%c0_9, %c0_10], %23 {strides = array<i32>} : memref<16x32xf32, #tpu.memory_space<vmem>>, vector<16x32xf32>,
    return
  }
  func.func @transform_0(%arg0: i32) -> (i32, i32) {
    %c0_i32 = arith.constant 0 : i32
    %c0_i32_0 = arith.constant 0 : i32
    return %arg0, %c0_i32 : i32, i32
  }
  func.func @transform_1(%arg0: i32) -> (i32, i32) {
    %c0_i32 = arith.constant 0 : i32
    %c0_i32_0 = arith.constant 0 : i32
    %c0_i32_1 = arith.constant 0 : i32
    return %c0_i32, %c0_i32_0 : i32, i32
  }
  func.func @transform_2(%arg0: i32) -> (i32, i32) {
    %c0_i32 = arith.constant 0 : i32
    %c0_i32_0 = arith.constant 0 : i32
    %c0_i32_1 = arith.constant 0 : i32
    return %c0_i32, %c0_i32_0 : i32, i32
  }
  func.func @transform_3(%arg0: i32) -> (i32, i32) {
    %c0_i32 = arith.constant 0 : i32
    %c0_i32_0 = arith.constant 0 : i32
    return %arg0, %c0_i32 : i32, i32
  }
}

</mosaic_0001>

<llo_original>
// kernel: tpu_custom_call.1
$region0: #{tpu_custom_call.1}
  #allocation0 [shape = 'u32[]', space=smem, size = 0x4, offset = 0x4, fixed_abs, tag = 'smem constant byte address 0x4 - core index']
  #allocation1 [shape = 'u32[144,128]{1,0:T(1,128)}', space=vmem, size = 0x12000, scoped, tag = 'internal scratch']
  %s0 = inlined_call_operand.hbm [shape: f32[16,32], index: 0, kind: input, shape index: {}]
  %s1 = inlined_call_operand.vmem [shape: f32[1,32], index: 1, kind: input, shape index: {}]
  %s2 = inlined_call_operand.vmem [shape: f32[1,32], index: 2, kind: input, shape index: {}]
  %s3 = inlined_call_operand.hbm [shape: f32[16,32], index: 3, kind: output, shape index: {}]
  %s4 = sld [smem:[#allocation0]]
  $region26: #{tpu_custom_call.1} parent=0
    _
  %s6 = ssub.s32 1, %s4
  %s7 = scalar_select 0, %s6, %s4
  $region1: #{tpu_custom_call.1} parent=0
    #allocation2 [shape = 'u8[8192]{0}', space=vmem, size = 0x2000, scoped, tag = 'input window, operand 0, single buffered']
    #allocation3 [shape = 's32[1]{0}', space=sflag, size = 0x4, scoped, tag = 'scoped memory for tpu_custom_call.1']
    #allocation4 [shape = 's32[1]{0}', space=sflag, size = 0x4, scoped, tag = 'scoped memory for tpu_custom_call.1']
    #allocation5 [shape = 'u8[8192]{0}', space=vmem, size = 0x2000, scoped, tag = 'output window, operand 0, single buffered']
    %8 = vsyncpa [#allocation3], 0
    %9 = vsyncpa [#allocation4], 0
    // Predicated region
    $region2: #{tpu_custom_call.1} parent=1 // pred_check
      _
    $region3: #{tpu_custom_call.1} parent=1 // pred_check_branch
      %11 = sbr.rel (0) target = $region5
    $region4: #{tpu_custom_call.1} parent=1 // pred_region
      %s13 = ssub.s32 256, 256
      %14 = vsyncadd [#allocation3], %s13
      %s15 = sshll.u32 [#allocation2], 4
      %s16 = int_to_ptr.vmem [resolvable:$true] %s15
      %21 = dma.hbm_to_vmem [thread:$0]  %s0, 256, %s16, [#allocation3], 128, 128, 8
    $region5: #{tpu_custom_call.1} parent=1 // pred_fallthru
      _
    // Predicated region
    $region6: #{tpu_custom_call.1} parent=1 // pred_check
      _
    $region7: #{tpu_custom_call.1} parent=1 // pred_check_branch
      %23 = sbr.rel (0) target = $region9
    $region8: #{tpu_custom_call.1} parent=1 // pred_region
      _
    $region9: #{tpu_custom_call.1} parent=1 // pred_fallthru
      _
    // Predicated region
    $region10: #{tpu_custom_call.1} parent=1 // pred_check
      _
    $region11: #{tpu_custom_call.1} parent=1 // pred_check_branch
      %25 = sbr.rel (0) target = $region13
    $region12: #{tpu_custom_call.1} parent=1 // pred_region
      _
    $region13: #{tpu_custom_call.1} parent=1 // pred_fallthru
      _
    // Predicated region
    $region14: #{tpu_custom_call.1} parent=1 // pred_check
      _
    $region15: #{tpu_custom_call.1} parent=1 // pred_check_branch
      %27 = sbr.rel (0) target = $region17
    $region16: #{tpu_custom_call.1} parent=1 // pred_region
      %28 = dma.done [#allocation3], 256
    $region17: #{tpu_custom_call.1} parent=1 // pred_fallthru
      _
    %v29 = vld [vmem:[#allocation2] sm:$0xff]
    %v30 = vld [vmem:[#allocation2 + $0x8] sm:$0xff]
    %vm31 = vcmask 261120
    %v32 = vsel %vm31, %v29, 0.0
    %33 = vadd.xlane.f32.xlu0 %v32
    %v34 = vpop.xlane.xlu0 %33
    %v35 = vsel %vm31, %v30, 0.0
    %36 = vadd.xlane.f32.xlu0 %v35
    %v37 = vpop.xlane.xlu0 %36
    %v38 = vmul.f32 %v34, 0.03125
    %v39 = vmul.f32 %v37, 0.03125
    %v40 = vsub.f32 %v29, %v38
    %v41 = vsub.f32 %v30, %v39
    %v42 = vmul.f32 %v40, %v40
    %v43 = vmul.f32 %v41, %v41
    %v44 = vsel %vm31, %v42, 0.0
    %45 = vadd.xlane.f32.xlu0 %v44
    %v46 = vpop.xlane.xlu0 %45
    %v47 = vsel %vm31, %v43, 0.0
    %48 = vadd.xlane.f32.xlu0 %v47
    %v49 = vpop.xlane.xlu0 %48
    %v50 = vmul.f32 %v46, 0.032258064
    %v51 = vmul.f32 %v49, 0.032258064
    %v52 = vrsqrt.pop %v50
    %v53 = vmul.f32 %v50, %v52
    %vm54 = vcmp.eq.f32.partialorder %v50, inf
    %v55 = vsel %vm54, %v50, %v53
    %vm56 = vcmp.eq.f32.partialorder %v50, 0.0
    %v57 = vand.u32 %v50, 2147483648
    %v58 = vsel %vm56, %v57, %v55
    %v59 = vrsqrt.pop %v51
    %v60 = vmul.f32 %v51, %v59
    %vm61 = vcmp.eq.f32.partialorder %v51, inf
    %v62 = vsel %vm61, %v51, %v60
    %vm63 = vcmp.eq.f32.partialorder %v51, 0.0
    %v64 = vand.u32 %v51, 2147483648
    %v65 = vsel %vm63, %v64, %v62
    %v66 = vadd.f32 %v58, 1e-06
    %v67 = vadd.f32 %v65, 1e-06
    %v68 = vrcp.pop %v66
    %v69 = vrcp.pop %v67
    %v70 = vld [vmem:[%s1] sm:$0x1]
    %v71 = vld [vmem:[%s2] sm:$0x1]
    %v72 = vmul.f32 %v40, %v68
    %v73 = vmul.f32 %v41, %v69
    %v75 = vlaneseq
    %v76 = vshrl.u32 %v75, 7
    %v77 = vsub.s32 0, %v76
    %v78 = vrot.slane %v70, %v77
    %v80 = vmul.f32 %v78, %v72
    %v81 = vmul.f32 %v78, %v73
    %v83 = vlaneseq
    %v84 = vshrl.u32 %v83, 7
    %v85 = vsub.s32 0, %v84
    %v86 = vrot.slane %v71, %v85
    %v88 = vadd.f32 %v80, %v86
    %v89 = vadd.f32 %v81, %v86
    %90 = vst.msk [vmem:[#allocation5] sm:$0xff] %vm31, %v88
    %91 = vst.msk [vmem:[#allocation5 + $0x8] sm:$0xff] %vm31, %v89
    // Predicated region
    $region18: #{tpu_custom_call.1} parent=1 // pred_check
      _
    $region19: #{tpu_custom_call.1} parent=1 // pred_check_branch
      %93 = sbr.rel (0) target = $region21
    $region20: #{tpu_custom_call.1} parent=1 // pred_region
      %s95 = ssub.s32 256, 256
      %96 = vsyncadd [#allocation4], %s95
      %s97 = sshll.u32 [#allocation5], 4
      %s98 = int_to_ptr.vmem [resolvable:$true] %s97
      %103 = dma.vmem_to_hbm [thread:$0]  %s98, 256, %s3, [#allocation4], 128, 128, 8
    $region21: #{tpu_custom_call.1} parent=1 // pred_fallthru
      _
    // Predicated region
    $region22: #{tpu_custom_call.1} parent=1 // pred_check
      _
    $region23: #{tpu_custom_call.1} parent=1 // pred_check_branch
      %105 = sbr.rel (0) target = $region25
    $region24: #{tpu_custom_call.1} parent=1 // pred_region
      %106 = dma.done [#allocation4], 256
    $region25: #{tpu_custom_call.1} parent=1 // pred_fallthru
      _
    %107 = vsyncpa [#allocation3], 1
    %108 = vsyncpa [#allocation4], 1

</llo_original>
